<compile_context>
chip_gen: v5e
topology: v5e:2x2
jax: 0.10.0
libtpu: 0.0.40
codegen_flags: <defaults>
</compile_context>

<pallas_src>
import functools

import jax
import jax.numpy as jnp
import numpy as np
from jax.experimental import pallas as pl
from jax.experimental.pallas import tpu as pltpu


_NUM_PARALLEL = 2                       # v7x has 2 TensorCores/chip; harmless elsewhere
_DEFAULT_VMEM_LIMIT = 48 * 1024 * 1024  # fits every generation (v7x per-TC VMEM = 64 MiB)
_VMEM_HEADROOM = 12 * 1024 * 1024       # targets + scratch + output + mosaic internal


def _ce_kernel(x_ref, t_ref, out_ref, loss_acc, zsq_acc, cnt_acc, *,
               ignore_index: int, n_rows: int, block_rows: int,
               blocks_per_core: int):
    p = pl.program_id(0)        # core-parallel axis (v7x megacore)
    i = pl.program_id(1)        # sequential reduction over row blocks

    @pl.when(i == 0)
    def _init():
        loss_acc[...] = jnp.zeros_like(loss_acc)
        zsq_acc[...] = jnp.zeros_like(zsq_acc)
        cnt_acc[...] = jnp.zeros_like(cnt_acc)

    x = x_ref[...].astype(jnp.float32)          # (tm, V); torch: .to(float32)
    t = t_ref[...]                              # (tm, 1) int32

    # Logical (unclamped) row ids for this block; rows >= n_rows are padding
    # (partial last block, or the clamped excess block of the parallel split).
    blk = p * blocks_per_core + i
    row_idx = blk * block_rows + jax.lax.broadcasted_iota(
        jnp.int32, (block_rows, 1), 0)
    row_ok = row_idx < n_rows                   # (tm, 1) bool

    # Numerically stable logsumexp along the vocab (lane) axis.
    m = jnp.max(x, axis=-1, keepdims=True)
    lse = m + jnp.log(jnp.sum(jnp.exp(x - m), axis=-1, keepdims=True))

    # Gather the target logit via lane-iota compare (vectorized one-hot sum).
    col = jax.lax.broadcasted_iota(jnp.int32, x.shape, 1)
    tgt = jnp.sum(jnp.where(col == t, x, 0.0), axis=-1, keepdims=True)

    valid = jnp.logical_and(row_ok, t != ignore_index)

    # Per-row partial sums; jnp.where (not multiply) so garbage rows of a
    # partial block can never contribute NaN/Inf.
    loss_acc[...] += jnp.where(valid, lse - tgt, 0.0)
    zsq_acc[...] += jnp.where(row_ok, lse * lse, 0.0)   # z-loss over ALL real rows
    cnt_acc[...] += valid.astype(jnp.float32)

    @pl.when(i == pl.num_programs(1) - 1)
    def _finalize():
        loss_s = jnp.sum(loss_acc[...])
        zsq_s = jnp.sum(zsq_acc[...])
        cnt_s = jnp.sum(cnt_acc[...])
        lane = jax.lax.broadcasted_iota(jnp.int32, (1, 1, 128), 2)
        out_ref[...] = (jnp.where(lane == 0, loss_s, 0.0)
                        + jnp.where(lane == 1, zsq_s, 0.0)
                        + jnp.where(lane == 2, cnt_s, 0.0))


def _pick_block_rows(n_rows, vocab, itemsize, vmem_limit):
    sub = max(8, 32 // itemsize)                       # 8 for f32, 16 for bf16
    budget = max(vmem_limit - _VMEM_HEADROOM, 2 * sub * vocab * itemsize)
    tm = budget // (2 * vocab * itemsize)              # 2 = double-buffered logits tile
    tm = max(sub, (tm // sub) * sub)
    tm = min(tm, 1024)                                 # per-step overhead already negligible
    n_ceil = -(-n_rows // sub) * sub
    return max(sub, min(tm, n_ceil))


def _ce_sums(logits2d, targets2d, *, ignore_index, block_rows=None,
             vmem_limit_bytes=None):
    """Runs the Pallas kernel. Returns (sum_ce, sum_lse^2, n_valid) f32 scalars."""
    n, v = logits2d.shape
    itemsize = jnp.dtype(logits2d.dtype).itemsize
    vmem_limit = int(vmem_limit_bytes or _DEFAULT_VMEM_LIMIT)

    sub = max(8, 32 // itemsize)
    if block_rows is None:
        tm = _pick_block_rows(n, v, itemsize, vmem_limit)
    else:
        tm = max(sub, -(-int(block_rows) // sub) * sub)
    # Make sure the scoped VMEM limit covers the chosen tile (huge-V fallback).
    vmem_limit = max(vmem_limit, 2 * tm * v * itemsize + (8 << 20))
    # TODO(synk): for very large vocab (V >= ~64K f32, esp. v7x) add a second
    # grid axis over V with a streaming logsumexp so tm stays large within VMEM.

    n_blocks = -(-n // tm)                       # ceil; no host-side padding of logits
    bpc = -(-n_blocks // _NUM_PARALLEL)          # row blocks per parallel slice

    def blk_map(p, i):
        # Clamp so the (at most one) excess logical block of the 2-way split
        # re-reads the last real block; its rows are fully masked in-kernel.
        return (jnp.minimum(p * bpc + i, n_blocks - 1), 0)

    kernel = functools.partial(
        _ce_kernel, ignore_index=ignore_index, n_rows=n,
        block_rows=tm, blocks_per_core=bpc)

    partials = pl.pallas_call(
        kernel,
        out_shape=jax.ShapeDtypeStruct((_NUM_PARALLEL, 1, 128), jnp.float32),
        grid_spec=pltpu.PrefetchScalarGridSpec(
            num_scalar_prefetch=0,
            grid=(_NUM_PARALLEL, bpc),
            in_specs=[
                pl.BlockSpec((tm, v), blk_map),
                pl.BlockSpec((tm, 1), blk_map),
            ],
            out_specs=pl.BlockSpec((1, 1, 128), lambda p, i: (p, 0, 0)),
            scratch_shapes=[
                pltpu.VMEM((tm, 1), jnp.float32),   # per-row loss partial sums
                pltpu.VMEM((tm, 1), jnp.float32),   # per-row lse^2 partial sums
                pltpu.VMEM((tm, 1), jnp.float32),   # per-row valid counts
            ],
        ),
        compiler_params=pltpu.CompilerParams(
            dimension_semantics=("parallel", "arbitrary"),
            vmem_limit_bytes=int(vmem_limit)),
    )(logits2d, targets2d)

    sums = jnp.sum(partials.reshape(_NUM_PARALLEL, 128), axis=0)
    return sums[0], sums[1], sums[2]


def cross_entropy_loss(input, target, *, ignore_index=-100, z_loss=0.0,
                       micro_average=False, block_rows=None,
                       vmem_limit_bytes=None):
    """Pallas equivalent of CrossEntropyLoss.forward (fast=False path).

    input:  (..., V) logits (any float dtype; upcast to f32 in-kernel)
    target: (...) integer class ids, ignore_index marks ignored positions.
    Returns (loss, loss_dict).
    """
    v = input.shape[-1]
    logits2d = input.reshape(-1, v)                # keep dtype; upcast in-kernel
    targets2d = target.reshape(-1, 1).astype(jnp.int32)
    n_rows = logits2d.shape[0]

    sum_ce, sum_zsq, n_valid_f = _ce_sums(
        logits2d, targets2d, ignore_index=ignore_index,
        block_rows=block_rows, vmem_limit_bytes=vmem_limit_bytes)

    if micro_average:
        # F.cross_entropy(..., reduction='sum') / clamp(n_targets, 1)
        n_targets = jnp.maximum(n_valid_f, 1.0)
        cross_entropy = sum_ce / n_targets
    else:
        # reduction='mean' over non-ignored rows (NaN/Inf if all rows ignored,
        # matching torch semantics)
        cross_entropy = sum_ce / n_valid_f
    loss = cross_entropy
    loss_dict = {'cross entropy': cross_entropy}

    if z_loss > 0:
        if micro_average:
            zl = sum_zsq / jnp.maximum(n_valid_f, 1.0)
        else:
            zl = sum_zsq / n_rows                   # mean over ALL rows (torch code)
        loss_dict['z-loss'] = zl
        loss = loss + z_loss * zl
    if micro_average:
        loss_dict['n_targets'] = jnp.maximum(n_valid_f, 1.0).astype(jnp.int32)
    return loss, loss_dict


def _reference(input, target, *, ignore_index=-100, z_loss=0.0,
               micro_average=False):
    """Pure-JAX reference mirroring the torch forward, for verification."""
    v = input.shape[-1]
    x = input.reshape(-1, v).astype(jnp.float32)
    t = target.reshape(-1)
    lse = jax.scipy.special.logsumexp(x, axis=-1)
    tgt = jnp.take_along_axis(x, jnp.clip(t, 0, v - 1)[:, None], axis=-1)[:, 0]
    valid = (t != ignore_index)
    per = jnp.where(valid, lse - tgt, 0.0)
    nv = jnp.sum(valid.astype(jnp.float32))
    if micro_average:
        ce = jnp.sum(per) / jnp.maximum(nv, 1.0)
    else:
        ce = jnp.sum(per) / nv
    loss = ce
    if z_loss > 0:
        zl = (jnp.sum(lse ** 2) / jnp.maximum(nv, 1.0)) if micro_average \
            else jnp.mean(lse ** 2)
        loss = loss + z_loss * zl
    return loss


if __name__ == "__main__":
    key = jax.random.PRNGKey(0)
    k1, k2, k3, k4 = jax.random.split(key, 4)

    # Case 1: small (batch, seq, vocab), default config (auto tile -> single block)
    B, S, V = 2, 8, 128
    logits = jax.random.normal(k1, (B, S, V), dtype=jnp.float32)
    targets = jax.random.randint(k2, (B, S), 0, V, dtype=jnp.int32)
    targets = targets.at[0, 0].set(-100)      # exercise ignore_index

    loss, loss_dict = cross_entropy_loss(logits, targets)
    jax.block_until_ready(loss)
    np.testing.assert_allclose(np.asarray(loss),
                               np.asarray(_reference(logits, targets)),
                               rtol=1e-5, atol=1e-5)

    # Case 2: bf16 logits, ragged N (partial last block + odd block count so the
    # clamped-block / dual-accumulator / parallel-axis paths are exercised),
    # z-loss + micro_average, forced small tile.
    B2, S2, V2 = 4, 100, 256
    logits2 = jax.random.normal(k3, (B2, S2, V2), dtype=jnp.bfloat16)
    targets2 = jax.random.randint(k4, (B2, S2), 0, V2, dtype=jnp.int32)
    targets2 = targets2.at[1, :10].set(-100)

    loss2, loss_dict2 = cross_entropy_loss(logits2, targets2, z_loss=1e-4,
                                           micro_average=True, block_rows=64)
    jax.block_until_ready(loss2)
    np.testing.assert_allclose(
        np.asarray(loss2),
        np.asarray(_reference(logits2, targets2, z_loss=1e-4,
                              micro_average=True)),
        rtol=1e-4, atol=1e-4)

    print("KERNEL_OK")
</pallas_src>

<mosaic_0001>
module attributes {stable_mosaic.version = 11 : i64} {
  func.func @_ce_kernel(%arg0: i32, %arg1: i32, %arg2: memref<16x128xf32, #tpu.memory_space<vmem>>, %arg3: memref<16x1xi32, #tpu.memory_space<vmem>>, %arg4: memref<1x1x128xf32, #tpu.memory_space<vmem>>, %arg5: memref<16x1xf32, #tpu.memory_space<vmem>>, %arg6: memref<16x1xf32, #tpu.memory_space<vmem>>, %arg7: memref<16x1xf32, #tpu.memory_space<vmem>>) attributes {dimension_semantics = [#tpu.dimension_semantics<parallel>, #tpu.dimension_semantics<arbitrary>], iteration_bounds = array<i64: 2, 1>, scalar_prefetch = 0 : i64, scratch_operands = 3 : i64, tpu.core_type = #tpu.core_type<tc>, window_params = [{transform_indices = @transform_0, window_bounds = array<i64: 16, 128>}, {transform_indices = @transform_1, window_bounds = array<i64: 16, 1>}, {transform_indices = @transform_2, window_bounds = array<i64: 1, 1, 128>}]} {
    %c0_i32 = arith.constant 0 : i32
    %0 = arith.cmpi eq, %arg1, %c0_i32 : i32
    %1 = arith.extui %0 : i1 to i32
    %c0_i32_0 = arith.constant 0 : i32
    %2 = arith.cmpi ne, %1, %c0_i32_0 : i32
    scf.if %2 {
      %cst_24 = arith.constant 0.000000e+00 : f32
      %52 = vector.broadcast %cst_24 : f32 to vector<16x1xf32>
      %c0_25 = arith.constant 0 : index
      %c0_26 = arith.constant 0 : index
      %53 = vector.load %arg5[%c0_25, %c0_26] : memref<16x1xf32, #tpu.memory_space<vmem>>, vector<16x1xf32>
      tpu.vector_store %arg5[%c0_25, %c0_26], %52 {strides = array<i32>} : memref<16x1xf32, #tpu.memory_space<vmem>>, vector<16x1xf32>,
      %cst_27 = arith.constant 0.000000e+00 : f32
      %54 = vector.broadcast %cst_27 : f32 to vector<16x1xf32>
      %c0_28 = arith.constant 0 : index
      %c0_29 = arith.constant 0 : index
      %55 = vector.load %arg6[%c0_28, %c0_29] : memref<16x1xf32, #tpu.memory_space<vmem>>, vector<16x1xf32>
      tpu.vector_store %arg6[%c0_28, %c0_29], %54 {strides = array<i32>} : memref<16x1xf32, #tpu.memory_space<vmem>>, vector<16x1xf32>,
      %cst_30 = arith.constant 0.000000e+00 : f32
      %56 = vector.broadcast %cst_30 : f32 to vector<16x1xf32>
      %c0_31 = arith.constant 0 : index
      %c0_32 = arith.constant 0 : index
      %57 = vector.load %arg7[%c0_31, %c0_32] : memref<16x1xf32, #tpu.memory_space<vmem>>, vector<16x1xf32>
      tpu.vector_store %arg7[%c0_31, %c0_32], %56 {strides = array<i32>} : memref<16x1xf32, #tpu.memory_space<vmem>>, vector<16x1xf32>,
    } else {
    }
    %c0 = arith.constant 0 : index
    %c0_1 = arith.constant 0 : index
    %3 = vector.load %arg2[%c0, %c0_1] : memref<16x128xf32, #tpu.memory_space<vmem>>, vector<16x128xf32>
    %c0_2 = arith.constant 0 : index
    %c0_3 = arith.constant 0 : index
    %4 = vector.load %arg3[%c0_2, %c0_3] : memref<16x1xi32, #tpu.memory_space<vmem>>, vector<16x1xi32>
    %c1_i32 = arith.constant 1 : i32
    %5 = arith.muli %arg0, %c1_i32 : i32
    %6 = arith.addi %5, %arg1 : i32
    %c16_i32 = arith.constant 16 : i32
    %7 = arith.muli %6, %c16_i32 : i32
    %8 = tpu.iota {dimensions = array<i32: 0>} : vector<16x1xi32>
    %9 = vector.broadcast %7 : i32 to vector<16x1xi32>
    %10 = arith.addi %9, %8 : vector<16x1xi32>
    %c16_i32_4 = arith.constant 16 : i32
    %11 = vector.broadcast %c16_i32_4 : i32 to vector<16x1xi32>
    %12 = arith.cmpi slt, %10, %11 : vector<16x1xi32>
    %cst = arith.constant dense<0xFF800000> : vector<16xf32>
    %13 = vector.multi_reduction <maximumf>, %3, %cst [1] : vector<16x128xf32> to vector<16xf32>
    %14 = vector.shape_cast %13 : vector<16xf32> to vector<16x1xf32>
    %15 = vector.broadcast %14 : vector<16x1xf32> to vector<16x128xf32>
    %16 = arith.subf %3, %15 : vector<16x128xf32>
    %17 = math.exp %16 : vector<16x128xf32>
    %cst_5 = arith.constant dense<0.000000e+00> : vector<16xf32>
    %18 = vector.multi_reduction <add>, %17, %cst_5 [1] : vector<16x128xf32> to vector<16xf32>
    %19 = vector.shape_cast %18 : vector<16xf32> to vector<16x1xf32>
    %20 = math.log %19 : vector<16x1xf32>
    %21 = arith.addf %14, %20 : vector<16x1xf32>
    %22 = tpu.iota {dimensions = array<i32: 1>} : vector<16x128xi32>
    %23 = vector.broadcast %4 : vector<16x1xi32> to vector<16x128xi32>
    %24 = arith.cmpi eq, %22, %23 : vector<16x128xi32>
    %cst_6 = arith.constant 0.000000e+00 : f32
    %25 = vector.broadcast %cst_6 : f32 to vector<16x128xf32>
    %26 = arith.select %24, %3, %25 : vector<16x128xi1>, vector<16x128xf32>
    %cst_7 = arith.constant dense<0.000000e+00> : vector<16xf32>
    %27 = vector.multi_reduction <add>, %26, %cst_7 [1] : vector<16x128xf32> to vector<16xf32>
    %28 = vector.shape_cast %27 : vector<16xf32> to vector<16x1xf32>
    %c-100_i32 = arith.constant -100 : i32
    %29 = vector.broadcast %c-100_i32 : i32 to vector<16x1xi32>
    %30 = arith.cmpi ne, %4, %29 : vector<16x1xi32>
    %31 = arith.andi %12, %30 : vector<16x1xi1>
    %c0_8 = arith.constant 0 : index
    %c0_9 = arith.constant 0 : index
    %32 = vector.load %arg5[%c0_8, %c0_9] : memref<16x1xf32, #tpu.memory_space<vmem>>, vector<16x1xf32>
    %33 = arith.subf %21, %28 : vector<16x1xf32>
    %cst_10 = arith.constant 0.000000e+00 : f32
    %34 = vector.broadcast %cst_10 : f32 to vector<16x1xf32>
    %35 = arith.select %31, %33, %34 : vector<16x1xi1>, vector<16x1xf32>
    %36 = arith.addf %32, %35 : vector<16x1xf32>
    %c0_11 = arith.constant 0 : index
    %c0_12 = arith.constant 0 : index
    %37 = vector.load %arg5[%c0_11, %c0_12] : memref<16x1xf32, #tpu.memory_space<vmem>>, vector<16x1xf32>
    tpu.vector_store %arg5[%c0_11, %c0_12], %36 {strides = array<i32>} : memref<16x1xf32, #tpu.memory_space<vmem>>, vector<16x1xf32>,
    %c0_13 = arith.constant 0 : index
    %c0_14 = arith.constant 0 : index
    %38 = vector.load %arg6[%c0_13, %c0_14] : memref<16x1xf32, #tpu.memory_space<vmem>>, vector<16x1xf32>
    %39 = arith.mulf %21, %21 : vector<16x1xf32>
    %cst_15 = arith.constant 0.000000e+00 : f32
    %40 = vector.broadcast %cst_15 : f32 to vector<16x1xf32>
    %41 = arith.select %12, %39, %40 : vector<16x1xi1>, vector<16x1xf32>
    %42 = arith.addf %38, %41 : vector<16x1xf32>
    %c0_16 = arith.constant 0 : index
    %c0_17 = arith.constant 0 : index
    %43 = vector.load %arg6[%c0_16, %c0_17] : memref<16x1xf32, #tpu.memory_space<vmem>>, vector<16x1xf32>
    tpu.vector_store %arg6[%c0_16, %c0_17], %42 {strides = array<i32>} : memref<16x1xf32, #tpu.memory_space<vmem>>, vector<16x1xf32>,
    %c0_18 = arith.constant 0 : index
    %c0_19 = arith.constant 0 : index
    %44 = vector.load %arg7[%c0_18, %c0_19] : memref<16x1xf32, #tpu.memory_space<vmem>>, vector<16x1xf32>
    %45 = arith.extui %31 : vector<16x1xi1> to vector<16x1xi32>
    %46 = arith.sitofp %45 : vector<16x1xi32> to vector<16x1xf32>
    %47 = arith.addf %44, %46 : vector<16x1xf32>
    %c0_20 = arith.constant 0 : index
    %c0_21 = arith.constant 0 : index
    %48 = vector.load %arg7[%c0_20, %c0_21] : memref<16x1xf32, #tpu.memory_space<vmem>>, vector<16x1xf32>
    tpu.vector_store %arg7[%c0_20, %c0_21], %47 {strides = array<i32>} : memref<16x1xf32, #tpu.memory_space<vmem>>, vector<16x1xf32>,
    %c0_i32_22 = arith.constant 0 : i32
    %49 = arith.cmpi eq, %arg1, %c0_i32_22 : i32
    %50 = arith.extui %49 : i1 to i32
    %c0_i32_23 = arith.constant 0 : i32
    %51 = arith.cmpi ne, %50, %c0_i32_23 : i32
    scf.if %51 {
      %c0_24 = arith.constant 0 : index
      %c0_25 = arith.constant 0 : index
      %52 = vector.load %arg5[%c0_24, %c0_25] : memref<16x1xf32, #tpu.memory_space<vmem>>, vector<16x1xf32>
      %53 = vector.shape_cast %52 : vector<16x1xf32> to vector<1x16x1xf32>
      %cst_26 = arith.constant dense<0.000000e+00> : vector<1xf32>
      %54 = vector.multi_reduction <add>, %53, %cst_26 [1, 2] : vector<1x16x1xf32> to vector<1xf32>
      %55 = vector.shape_cast %54 : vector<1xf32> to vector<1x1x1xf32>
      %56 = vector.extract %55[0, 0, 0] : f32 from vector<1x1x1xf32>
      %c0_27 = arith.constant 0 : index
      %c0_28 = arith.constant 0 : index
      %57 = vector.load %arg6[%c0_27, %c0_28] : memref<16x1xf32, #tpu.memory_space<vmem>>, vector<16x1xf32>
      %58 = vector.shape_cast %57 : vector<16x1xf32> to vector<1x16x1xf32>
      %cst_29 = arith.constant dense<0.000000e+00> : vector<1xf32>
      %59 = vector.multi_reduction <add>, %58, %cst_29 [1, 2] : vector<1x16x1xf32> to vector<1xf32>
      %60 = vector.shape_cast %59 : vector<1xf32> to vector<1x1x1xf32>
      %61 = vector.extract %60[0, 0, 0] : f32 from vector<1x1x1xf32>
      %c0_30 = arith.constant 0 : index
      %c0_31 = arith.constant 0 : index
      %62 = vector.load %arg7[%c0_30, %c0_31] : memref<16x1xf32, #tpu.memory_space<vmem>>, vector<16x1xf32>
      %63 = vector.shape_cast %62 : vector<16x1xf32> to vector<1x16x1xf32>
      %cst_32 = arith.constant dense<0.000000e+00> : vector<1xf32>
      %64 = vector.multi_reduction <add>, %63, %cst_32 [1, 2] : vector<1x16x1xf32> to vector<1xf32>
      %65 = vector.shape_cast %64 : vector<1xf32> to vector<1x1x1xf32>
      %66 = vector.extract %65[0, 0, 0] : f32 from vector<1x1x1xf32>
      %67 = tpu.iota {dimensions = array<i32: 2>} : vector<1x1x128xi32>
      %c0_i32_33 = arith.constant 0 : i32
      %68 = vector.broadcast %c0_i32_33 : i32 to vector<1x1x128xi32>
      %69 = arith.cmpi eq, %67, %68 : vector<1x1x128xi32>
      %cst_34 = arith.constant 0.000000e+00 : f32
      %70 = vector.broadcast %56 : f32 to vector<1x1x128xf32>
      %71 = vector.broadcast %cst_34 : f32 to vector<1x1x128xf32>
      %72 = arith.select %69, %70, %71 : vector<1x1x128xi1>, vector<1x1x128xf32>
      %c1_i32_35 = arith.constant 1 : i32
      %73 = vector.broadcast %c1_i32_35 : i32 to vector<1x1x128xi32>
      %74 = arith.cmpi eq, %67, %73 : vector<1x1x128xi32>
      %cst_36 = arith.constant 0.000000e+00 : f32
      %75 = vector.broadcast %61 : f32 to vector<1x1x128xf32>
      %76 = vector.broadcast %cst_36 : f32 to vector<1x1x128xf32>
      %77 = arith.select %74, %75, %76 : vector<1x1x128xi1>, vector<1x1x128xf32>
      %78 = arith.addf %72, %77 : vector<1x1x128xf32>
      %c2_i32 = arith.constant 2 : i32
      %79 = vector.broadcast %c2_i32 : i32 to vector<1x1x128xi32>
      %80 = arith.cmpi eq, %67, %79 : vector<1x1x128xi32>
      %cst_37 = arith.constant 0.000000e+00 : f32
      %81 = vector.broadcast %66 : f32 to vector<1x1x128xf32>
      %82 = vector.broadcast %cst_37 : f32 to vector<1x1x128xf32>
      %83 = arith.select %80, %81, %82 : vector<1x1x128xi1>, vector<1x1x128xf32>
      %84 = arith.addf %78, %83 : vector<1x1x128xf32>
      %c0_38 = arith.constant 0 : index
      %c0_39 = arith.constant 0 : index
      %c0_40 = arith.constant 0 : index
      %85 = vector.load %arg4[%c0_38, %c0_39, %c0_40] : memref<1x1x128xf32, #tpu.memory_space<vmem>>, vector<1x1x128xf32>
      tpu.vector_store %arg4[%c0_38, %c0_39, %c0_40], %84 {strides = array<i32>} : memref<1x1x128xf32, #tpu.memory_space<vmem>>, vector<1x1x128xf32>,
    } else {
    }
    return
  }
  func.func @transform_0(%arg0: i32, %arg1: i32) -> (i32, i32) {
    %c1_i32 = arith.constant 1 : i32
    %0 = arith.muli %arg0, %c1_i32 : i32
    %1 = arith.addi %0, %arg1 : i32
    %c0_i32 = arith.constant 0 : i32
    %2 = arith.minsi %1, %c0_i32 : i32
    %c0_i32_0 = arith.constant 0 : i32
    %c0_i32_1 = arith.constant 0 : i32
    return %2, %c0_i32_0 : i32, i32
  }
  func.func @transform_1(%arg0: i32, %arg1: i32) -> (i32, i32) {
    %c1_i32 = arith.constant 1 : i32
    %0 = arith.muli %arg0, %c1_i32 : i32
    %1 = arith.addi %0, %arg1 : i32
    %c0_i32 = arith.constant 0 : i32
    %2 = arith.minsi %1, %c0_i32 : i32
    %c0_i32_0 = arith.constant 0 : i32
    %c0_i32_1 = arith.constant 0 : i32
    return %2, %c0_i32_0 : i32, i32
  }
  func.func @transform_2(%arg0: i32, %arg1: i32) -> (i32, i32, i32) {
    %c0_i32 = arith.constant 0 : i32
    %c0_i32_0 = arith.constant 0 : i32
    %c0_i32_1 = arith.constant 0 : i32
    return %arg0, %c0_i32, %c0_i32_0 : i32, i32, i32
  }
}

</mosaic_0001>

<llo_original>
// kernel: tpu_custom_call.1
$region0: #{tpu_custom_call.1}
  #allocation0 [shape = 'u32[]', space=smem, size = 0x4, offset = 0x4, fixed_abs, tag = 'smem constant byte address 0x4 - core index']
  #allocation1 [shape = 'u32[72,128]{1,0:T(1,128)}', space=vmem, size = 0x9000, scoped, tag = 'internal scratch']
  #allocation2 [shape = 'f32[16,1]{1,0:T(8,128)}', space=vmem, size = 0x2000, scoped, tag = 'scratch operand']
  #allocation3 [shape = 'f32[16,1]{1,0:T(8,128)}', space=vmem, size = 0x2000, scoped, tag = 'scratch operand']
  #allocation4 [shape = 'f32[16,1]{1,0:T(8,128)}', space=vmem, size = 0x2000, scoped, tag = 'scratch operand']
  %s0 = inlined_call_operand.vmem [shape: f32[16,128], index: 0, kind: input, shape index: {}]
  %s1 = inlined_call_operand.vmem [shape: s32[16,1], index: 1, kind: input, shape index: {}]
  %s2 = inlined_call_operand.hbm [shape: f32[2,1,128], index: 2, kind: output, shape index: {}]
  %s3 = sld [smem:[#allocation0]]
  $region49: #{tpu_custom_call.1} parent=0
    _
  %s5 = ssub.s32 1, %s3
  %s6 = scalar_select 0, %s5, %s3
  $region1: #{tpu_custom_call.1} parent=0
    #allocation5 [shape = 'u8[1024]{0}', space=vmem, size = 0x400, scoped, tag = 'output window, operand 0']
    #allocation6 [shape = 's32[2]{0}', space=sflag, size = 0x8, scoped, tag = 'scoped memory for tpu_custom_call.1']
    %7 = vsyncpa [#allocation6], 0
    %s8 = scalar_lea.sflag [#allocation6], 1
    %9 = vsyncpa %s8, 0
    loop: start=0, step=1, limit=4
    $region2: #{tpu_custom_call.1} parent=1 // loop_pre_header
      _
    $region3: #{tpu_custom_call.1} parent=1 // loop_header
      %s11 = sphi 0, %s15
      %p12 = scmp.ge.s32.totalorder %s11, 4
      %s18 = sphi 0, %s30
      %s19 = sphi 0, %s26
      %s20 = sphi 0, %s18
      %s21 = sphi 0, %s19
      %s22 = sphi 0, %s20
      %s23 = sphi 0, %s21
      %s39 = sphi 0, %s41
      %s42 = sphi 0, %s39
      %s43 = sphi 0, %s42
      %s59 = sphi 0, %s43
      %s71 = sphi 0, %s73
      %s74 = sphi 0, %s71
      %s75 = sphi 0, %s74
      %s91 = sphi 0, %s75
      %s97 = sphi 0, %s99
      %s100 = sphi 0, %s97
      %s101 = sphi 0, %s100
      %s117 = sphi 0, %s101
    $region4: #{tpu_custom_call.1} parent=1 // loop_header_branch
      %14 = sbr.rel (%p12) target = $region8
    $region5: #{tpu_custom_call.1} parent=1 // loop_body
      %s16 = ssub.s32 %s11, 1
      %s17 = ssub.s32 %s11, 2
      %s24 = sadd.s32 1, %s19
      %p25 = scmp.ge.s32.totalorder %s24, 1
      %s26 = scalar_select %p25, 0, %s24
      %s27 = sadd.s32 1, %s18
      %s28 = scalar_select %p25, %s27, %s18
      %p29 = scmp.ge.s32.totalorder %s28, 2
      %s30 = scalar_select %p29, 0, %s28
      %s31 = sadd.s32 %s18, %s19
      %p32 = scmp.lt.s32.totalorder %s31, 0
      %s33 = scalar_select %p32, %s31, 0
      %s34 = sadd.s32 %s30, %s26
      %p35 = scmp.lt.s32.totalorder %s34, 0
      %s36 = scalar_select %p35, %s34, 0
      %s37 = ssub.s32 %s33, %s36
      %p38 = scmp.eq.s32.totalorder %s37, 0
      %s40 = sadd.s32 %s39, 1
      %s41 = scalar_select %p38, %s39, %s40
      %p44 = pneg %p38
      %p45 = scmp.eq.s32.totalorder %s11, 1
      %p46 = por %p44, %p45
      %p47 = scmp.ne.s32.totalorder %s39, %s42
      %p48 = scmp.eq.s32.totalorder %s11, 0
      %p49 = por %p47, %p48
      %p50 = scmp.ne.s32.totalorder %s39, %s42
      %p51 = scmp.eq.s32.totalorder %s16, 1
      %p52 = por %p50, %p51
      %p53 = scmp.ne.s32.totalorder %s42, %s43
      %p54 = scmp.eq.s32.totalorder %s16, 0
      %p55 = por %p53, %p54
      %p56 = scmp.ne.s32.totalorder %s42, %s43
      %p57 = scmp.eq.s32.totalorder %s17, 1
      %p58 = por %p56, %p57
      %p60 = scmp.ne.s32.totalorder %s43, %s59
      %p61 = scmp.eq.s32.totalorder %s17, 0
      %p62 = por %p60, %p61
      %s63 = sadd.s32 %s18, %s19
      %p64 = scmp.lt.s32.totalorder %s63, 0
      %s65 = scalar_select %p64, %s63, 0
      %s66 = sadd.s32 %s30, %s26
      %p67 = scmp.lt.s32.totalorder %s66, 0
      %s68 = scalar_select %p67, %s66, 0
      %s69 = ssub.s32 %s65, %s68
      %p70 = scmp.eq.s32.totalorder %s69, 0
      %s72 = sadd.s32 %s71, 1
      %s73 = scalar_select %p70, %s71, %s72
      %p76 = pneg %p70
      %p77 = scmp.eq.s32.totalorder %s11, 1
      %p78 = por %p76, %p77
      %p79 = scmp.ne.s32.totalorder %s71, %s74
      %p80 = scmp.eq.s32.totalorder %s11, 0
      %p81 = por %p79, %p80
      %p82 = scmp.ne.s32.totalorder %s71, %s74
      %p83 = scmp.eq.s32.totalorder %s16, 1
      %p84 = por %p82, %p83
      %p85 = scmp.ne.s32.totalorder %s74, %s75
      %p86 = scmp.eq.s32.totalorder %s16, 0
      %p87 = por %p85, %p86
      %p88 = scmp.ne.s32.totalorder %s74, %s75
      %p89 = scmp.eq.s32.totalorder %s17, 1
      %p90 = por %p88, %p89
      %p92 = scmp.ne.s32.totalorder %s75, %s91
      %p93 = scmp.eq.s32.totalorder %s17, 0
      %p94 = por %p92, %p93
      %s95 = ssub.s32 %s18, %s30
      %p96 = scmp.eq.s32.totalorder %s95, 0
      %s98 = sadd.s32 %s97, 1
      %s99 = scalar_select %p96, %s97, %s98
      %p102 = pneg %p96
      %p103 = scmp.eq.s32.totalorder %s11, 1
      %p104 = por %p102, %p103
      %p105 = scmp.ne.s32.totalorder %s97, %s100
      %p106 = scmp.eq.s32.totalorder %s11, 0
      %p107 = por %p105, %p106
      %p108 = scmp.ne.s32.totalorder %s97, %s100
      %p109 = scmp.eq.s32.totalorder %s16, 1
      %p110 = por %p108, %p109
      %p111 = scmp.ne.s32.totalorder %s100, %s101
      %p112 = scmp.eq.s32.totalorder %s16, 0
      %p113 = por %p111, %p112
      %p114 = scmp.ne.s32.totalorder %s100, %s101
      %p115 = scmp.eq.s32.totalorder %s17, 1
      %p116 = por %p114, %p115
      %p118 = scmp.ne.s32.totalorder %s101, %s117
      %p119 = scmp.eq.s32.totalorder %s17, 0
      %p120 = por %p118, %p119
      %p121 = scmp.le.s32.totalorder 1, %s11
      %p122 = scmp.lt.s32.totalorder %s11, 3
      %p123 = pnand %p121, %p122
      %p124 = pneg %p123
      // Predicated region
      $region9: #{tpu_custom_call.1} parent=5 // pred_check
        _
      $region10: #{tpu_custom_call.1} parent=5 // pred_check_branch
        %126 = sbr.rel (%p123) target = $region12
      $region11: #{tpu_custom_call.1} parent=5 // pred_region
        %s127 = ssub.s32 %s11, 1
      $region12: #{tpu_custom_call.1} parent=5 // pred_fallthru
        _
      %p128 = scmp.lt.s32.totalorder %s11, 2
      // Predicated region
      $region13: #{tpu_custom_call.1} parent=5 // pred_check
        %p129 = pneg %p128
      $region14: #{tpu_custom_call.1} parent=5 // pred_check_branch
        %131 = sbr.rel (%p129) target = $region16
      $region15: #{tpu_custom_call.1} parent=5 // pred_region
        // Predicated region
        $region17: #{tpu_custom_call.1} parent=15 // pred_check
          %p132 = pneg %p49
        $region18: #{tpu_custom_call.1} parent=15 // pred_check_branch
          %134 = sbr.rel (%p132) target = $region20
        $region19: #{tpu_custom_call.1} parent=15 // pred_region
          %s135 = sadd.s32 %s18, %s19
          %p136 = scmp.lt.s32.totalorder %s135, 0
          %s137 = scalar_select %p136, %s135, 0
          %s138 = smul.u32 2, %s137
          %p139 = scmp.lt.s32.totalorder %s138, 1
          %s140 = scalar_select %p139, %s138, 1
          %s141 = smul.addr %s140, 8
          %s142 = scalar_lea.vmem %s0, %s141
          %s143 = sadd.s32 %s18, %s19
          %p144 = scmp.lt.s32.totalorder %s143, 0
          %s145 = scalar_select %p144, %s143, 0
          %s146 = smul.u32 2, %s145
        $region20: #{tpu_custom_call.1} parent=15 // pred_fallthru
          _
        // Predicated region
        $region21: #{tpu_custom_call.1} parent=15 // pred_check
          %p147 = pneg %p81
        $region22: #{tpu_custom_call.1} parent=15 // pred_check_branch
          %149 = sbr.rel (%p147) target = $region24
        $region23: #{tpu_custom_call.1} parent=15 // pred_region
          %s150 = sadd.s32 %s18, %s19
          %p151 = scmp.lt.s32.totalorder %s150, 0
          %s152 = scalar_select %p151, %s150, 0
          %s153 = smul.u32 2, %s152
          %p154 = scmp.lt.s32.totalorder %s153, 1
          %s155 = scalar_select %p154, %s153, 1
          %s156 = smul.addr %s155, 8
          %s157 = scalar_lea.vmem %s1, %s156
          %s158 = sadd.s32 %s18, %s19
          %p159 = scmp.lt.s32.totalorder %s158, 0
          %s160 = scalar_select %p159, %s158, 0
          %s161 = smul.u32 2, %s160
        $region24: #{tpu_custom_call.1} parent=15 // pred_fallthru
          _
      $region16: #{tpu_custom_call.1} parent=5 // pred_fallthru
        _
      %p162 = scmp.le.s32.totalorder 1, %s11
      %p163 = scmp.lt.s32.totalorder %s11, 3
      %p164 = pnand %p162, %p163
      %p165 = pneg %p164
      // Predicated region
      $region25: #{tpu_custom_call.1} parent=5 // pred_check
        _
      $region26: #{tpu_custom_call.1} parent=5 // pred_check_branch
        %167 = sbr.rel (%p164) target = $region28
      $region27: #{tpu_custom_call.1} parent=5 // pred_region
        %s168 = ssub.s32 %s11, 1
        %s169 = sadd.s32 %s20, %s21
        %p170 = scmp.lt.s32.totalorder %s169, 0
        %s171 = scalar_select %p170, %s169, 0
        %s172 = smul.u32 2, %s171
        %p173 = scmp.lt.s32.totalorder %s172, 1
        %s174 = scalar_select %p173, %s172, 1
        %s175 = smul.addr %s174, 8
        %s176 = scalar_lea.vmem %s0, %s175
        %p177 = pneg %p55
        %p178 = pneg %p52
        %s179 = sadd.s32 %s20, %s21
        %p180 = scmp.lt.s32.totalorder %s179, 0
        %s181 = scalar_select %p180, %s179, 0
        %s182 = smul.u32 2, %s181
        %p183 = scmp.lt.s32.totalorder %s182, 1
        %s184 = scalar_select %p183, %s182, 1
        %s185 = smul.addr %s184, 8
        %s186 = scalar_lea.vmem %s1, %s185
        %p187 = pneg %p87
        %p188 = pneg %p84
        %p189 = pneg %p113
        %p190 = pneg %p110
        %s191 = sand.u32 %s100, 1
        %s192 = scalar_lea.sflag [#allocation6], %s191
        %s193 = sand.u32 %s100, 1
        %s194 = scalar_lea.vmem [#allocation5], %s193
        %s195 = sadd.s32 %s20, %s21
        %p196 = scmp.lt.s32.totalorder %s195, 0
        %s197 = scalar_select %p196, %s195, 0
        %s198 = smul.u32 2, %s197
        %p199 = scmp.lt.s32.totalorder %s198, 1
        %s200 = scalar_select %p199, %s198, 1
        %s201 = smul.addr %s200, 8
        %s202 = scalar_lea.vmem %s0, %s201
        %s203 = sadd.s32 %s20, %s21
        %p204 = scmp.lt.s32.totalorder %s203, 0
        %s205 = scalar_select %p204, %s203, 0
        %s206 = smul.u32 2, %s205
        %s207 = sadd.s32 %s20, %s21
        %p208 = scmp.lt.s32.totalorder %s207, 0
        %s209 = scalar_select %p208, %s207, 0
        %s210 = smul.u32 2, %s209
        %p211 = scmp.lt.s32.totalorder %s210, 1
        %s212 = scalar_select %p211, %s210, 1
        %s213 = smul.addr %s212, 8
        %s214 = scalar_lea.vmem %s1, %s213
        %s215 = sadd.s32 %s20, %s21
        %p216 = scmp.lt.s32.totalorder %s215, 0
        %s217 = scalar_select %p216, %s215, 0
        %s218 = smul.u32 2, %s217
        %p219 = scmp.eq.s32.totalorder %s21, 0
        // Predicated region
        $region29: #{tpu_custom_call.1} parent=27 // pred_check
          %p220 = pneg %p219
        $region30: #{tpu_custom_call.1} parent=27 // pred_check_branch
          %222 = sbr.rel (%p220) target = $region32
        $region31: #{tpu_custom_call.1} parent=27 // pred_region
          %vm223 = vcmask 7168
          %224 = vst.msk [vmem:[#allocation2] sm:$0xff] %vm223, 0.0
          %225 = vst.msk [vmem:[#allocation2 + $0x8] sm:$0xff] %vm223, 0.0
          %226 = vst.msk [vmem:[#allocation3] sm:$0xff] %vm223, 0.0
          %227 = vst.msk [vmem:[#allocation3 + $0x8] sm:$0xff] %vm223, 0.0
          %228 = vst.msk [vmem:[#allocation4] sm:$0xff] %vm223, 0.0
          %229 = vst.msk [vmem:[#allocation4 + $0x8] sm:$0xff] %vm223, 0.0
        $region32: #{tpu_custom_call.1} parent=27 // pred_fallthru
          _
        %v230 = vld [vmem:[%s202] sm:$0xff]
        %v231 = vld [vmem:[%s202 + $0x8] sm:$0xff]
        %v232 = vld [vmem:[%s214] sm:$0xff]
        %v233 = vld [vmem:[%s214 + $0x8] sm:$0xff]
        %s234 = sadd.s32 %s20, %s21
        %s235 = smul.u32 %s234, 16
        %v236 = vlaneseq
        %v237 = vshrl.u32 %v236, 7
        %v238 = vadd.s32 %v237, 8
        %v239 = vstv %s235
        %v240 = vadd.s32 %v239, %v237
        %v241 = vadd.s32 %v239, %v238
        %vm242 = vcmp.lt.s32.totalorder %v240, 16
        %vm243 = vcmp.lt.s32.totalorder %v241, 16
        %244 = vmax.xlane.f32.xlu0 %v230
        %v245 = vpop.xlane.xlu0 %244
        %246 = vmax.xlane.f32.xlu0 %v231
        %v247 = vpop.xlane.xlu0 %246
        %v248 = vsub.f32 %v230, %v245
        %v249 = vsub.f32 %v231, %v247
        %v250 = vmul.f32 %v248, 1.442695
        %v251 = vpow.pop %v250
        %v252 = vmul.f32 %v249, 1.442695
        %v253 = vpow.pop %v252
        %254 = vadd.xlane.f32.xlu0 %v251
        %v255 = vpop.xlane.xlu0 %254
        %256 = vadd.xlane.f32.xlu0 %v253
        %v257 = vpop.xlane.xlu0 %256
        %v258 = vlog2.pop %v255
        %v259 = vmul.f32 %v258, 0.6931472
        %v260 = vlog2.pop %v257
        %v261 = vmul.f32 %v260, 0.6931472
        %v262 = vadd.f32 %v245, %v259
        %v263 = vadd.f32 %v247, %v261
        %v264 = vlaneseq
        %v265 = vand.u32 %v264, 127
        %266 = vset.pattern.permute.xlu0 0
        %267 = vperm.xlu0 %266, %v232
        %v268 = vpop.permute.xlu0 %267
        %269 = vset.pattern.permute.xlu0 0
        %270 = vperm.xlu0 %269, %v233
        %v271 = vpop.permute.xlu0 %270
        %vm272 = vcmp.eq.s32.totalorder %v265, %v268
        %vm273 = vcmp.eq.s32.totalorder %v265, %v271
        %v274 = vsel %vm272, %v230, 0.0
        %v275 = vsel %vm273, %v231, 0.0
        %276 = vadd.xlane.f32.xlu0 %v274
        %v277 = vpop.xlane.xlu0 %276
        %278 = vadd.xlane.f32.xlu0 %v275
        %v279 = vpop.xlane.xlu0 %278
        %vm280 = vcmp.ne.s32.totalorder %v232, 4294967196
        %vm281 = vcmp.ne.s32.totalorder %v233, 4294967196
        %vm282 = vmand %vm242, %vm280
        %vm283 = vmand %vm243, %vm281
        %v284 = vld [vmem:[#allocation2] sm:$0xff]
        %v285 = vld [vmem:[#allocation2 + $0x8] sm:$0xff]
        %v286 = vsub.f32 %v262, %v277
        %v287 = vsub.f32 %v263, %v279
        %v288 = vsel %vm282, %v286, 0.0
        %v289 = vsel %vm283, %v287, 0.0
        %v290 = vadd.f32 %v284, %v288
        %v291 = vadd.f32 %v285, %v289
        %vm292 = vcmask 7168
        %293 = vst.msk [vmem:[#allocation2] sm:$0xff] %vm292, %v290
        %294 = vst.msk [vmem:[#allocation2 + $0x8] sm:$0xff] %vm292, %v291
        %v295 = vld [vmem:[#allocation3] sm:$0xff]
        %v296 = vld [vmem:[#allocation3 + $0x8] sm:$0xff]
        %v297 = vmul.f32 %v262, %v262
        %v298 = vmul.f32 %v263, %v263
        %v299 = vsel %vm242, %v297, 0.0
        %v300 = vsel %vm243, %v298, 0.0
        %v301 = vadd.f32 %v295, %v299
        %v302 = vadd.f32 %v296, %v300
        %303 = vst.msk [vmem:[#allocation3] sm:$0xff] %vm292, %v301
        %304 = vst.msk [vmem:[#allocation3 + $0x8] sm:$0xff] %vm292, %v302
        %v305 = vld [vmem:[#allocation4] sm:$0xff]
        %v306 = vld [vmem:[#allocation4 + $0x8] sm:$0xff]
        %v307 = vsel %vm282, 1, 0
        %v308 = vsel %vm283, 1, 0
        %v309 = vcvt.s32.f32 %v307
        %v310 = vcvt.s32.f32 %v308
        %v311 = vadd.f32 %v305, %v309
        %v312 = vadd.f32 %v306, %v310
        %313 = vst.msk [vmem:[#allocation4] sm:$0xff] %vm292, %v311
        %314 = vst.msk [vmem:[#allocation4 + $0x8] sm:$0xff] %vm292, %v312
        // Predicated region
        $region33: #{tpu_custom_call.1} parent=27 // pred_check
          %p315 = pneg %p219
        $region34: #{tpu_custom_call.1} parent=27 // pred_check_branch
          %317 = sbr.rel (%p315) target = $region36
        $region35: #{tpu_custom_call.1} parent=27 // pred_region
          %v318 = vld [vmem:[#allocation2] sm:$0xff]
          %v319 = vld [vmem:[#allocation2 + $0x8] sm:$0xff]
          %v320 = vsel %vm292, %v318, 0.0
          %v321 = vsel %vm292, %v319, 0.0
          %v322 = vadd.f32 %v320, %v321
          %323 = vadd.xlane.f32.xlu0 %v322
          %v324 = vpop.xlane.xlu0 %323
          %v325 = vrot.slane %v324, 4
          %v326 = vadd.f32 %v324, %v325
          %v327 = vrot.slane %v326, 2
          %v328 = vadd.f32 %v326, %v327
          %v329 = vrot.slane %v328, 1
          %v330 = vadd.f32 %v328, %v329
          %s331 = vtos %v330
          %v332 = vld [vmem:[#allocation3] sm:$0xff]
          %v333 = vld [vmem:[#allocation3 + $0x8] sm:$0xff]
          %v334 = vsel %vm292, %v332, 0.0
          %v335 = vsel %vm292, %v333, 0.0
          %v336 = vadd.f32 %v334, %v335
          %337 = vadd.xlane.f32.xlu0 %v336
          %v338 = vpop.xlane.xlu0 %337
          %v339 = vrot.slane %v338, 4
          %v340 = vadd.f32 %v338, %v339
          %v341 = vrot.slane %v340, 2
          %v342 = vadd.f32 %v340, %v341
          %v343 = vrot.slane %v342, 1
          %v344 = vadd.f32 %v342, %v343
          %s345 = vtos %v344
          %v346 = vld [vmem:[#allocation4] sm:$0xff]
          %v347 = vld [vmem:[#allocation4 + $0x8] sm:$0xff]
          %v348 = vsel %vm292, %v346, 0.0
          %v349 = vsel %vm292, %v347, 0.0
          %v350 = vadd.f32 %v348, %v349
          %351 = vadd.xlane.f32.xlu0 %v350
          %v352 = vpop.xlane.xlu0 %351
          %v353 = vrot.slane %v352, 4
          %v354 = vadd.f32 %v352, %v353
          %v355 = vrot.slane %v354, 2
          %v356 = vadd.f32 %v354, %v355
          %v357 = vrot.slane %v356, 1
          %v358 = vadd.f32 %v356, %v357
          %s359 = vtos %v358
          %vm360 = vcmp.eq.s32.totalorder %v265, 0
          %v361 = vstv %s331
          %v362 = vsel %vm360, %v361, 0.0
          %vm363 = vcmp.eq.s32.totalorder %v265, 1
          %v364 = vstv %s345
          %v365 = vsel %vm363, %v364, 0.0
          %v366 = vadd.f32 %v362, %v365
          %vm367 = vcmp.eq.s32.totalorder %v265, 2
          %v368 = vstv %s359
          %v369 = vsel %vm367, %v368, 0.0
          %v370 = vadd.f32 %v366, %v369
          %371 = vst [vmem:[%s194] sm:$0x1] %v370
        $region36: #{tpu_custom_call.1} parent=27 // pred_fallthru
          _
        %s372 = sand.u32 %s100, 1
        %s373 = scalar_lea.sflag [#allocation6], %s372
        %s374 = sand.u32 %s100, 1
        %s375 = scalar_lea.vmem [#allocation5], %s374
        // Predicated region
        $region37: #{tpu_custom_call.1} parent=27 // pred_check
          %p376 = pneg %p110
        $region38: #{tpu_custom_call.1} parent=27 // pred_check_branch
          %378 = sbr.rel (%p376) target = $region40
        $region39: #{tpu_custom_call.1} parent=27 // pred_region
          %380 = vsyncadd %s373, 0
          %s381 = scalar_lea.hbm %s2, %s20
          %s383 = sshll.u32 %s375, 4
          %s384 = int_to_ptr.vmem [resolvable:$true] %s383
          %s385 = sshll.u32 %s381, 4
          %s386 = int_to_ptr.hbm [resolvable:$true] %s385
          %388 = dma.vmem_to_hbm [thread:$0]  %s384, 16, %s386, %s373
        $region40: #{tpu_custom_call.1} parent=27 // pred_fallthru
          _
      $region28: #{tpu_custom_call.1} parent=5 // pred_fallthru
        _
      %p389 = scmp.le.s32.totalorder 2, %s11
      // Predicated region
      $region41: #{tpu_custom_call.1} parent=5 // pred_check
        %p390 = pneg %p389
      $region42: #{tpu_custom_call.1} parent=5 // pred_check_branch
        %392 = sbr.rel (%p390) target = $region44
      $region43: #{tpu_custom_call.1} parent=5 // pred_region
        %s393 = ssub.s32 %s11, 2
        // Predicated region
        $region45: #{tpu_custom_call.1} parent=43 // pred_check
          %p394 = pneg %p116
        $region46: #{tpu_custom_call.1} parent=43 // pred_check_branch
          %396 = sbr.rel (%p394) target = $region48
        $region47: #{tpu_custom_call.1} parent=43 // pred_region
          %s397 = sand.u32 %s101, 1
          %s398 = scalar_lea.sflag [#allocation6], %s397
          %s399 = sand.u32 %s101, 1
          %s400 = scalar_lea.vmem [#allocation5], %s399
          %402 = dma.done %s398, 16
        $region48: #{tpu_custom_call.1} parent=43 // pred_fallthru
          _
      $region44: #{tpu_custom_call.1} parent=5 // pred_fallthru
        _
    $region6: #{tpu_custom_call.1} parent=1 // loop_footer
      %s15 = sadd.s32 1, %s11
    $region7: #{tpu_custom_call.1} parent=1 // loop_footer_branch
      %10 = sbr.rel target = $region3
    $region8: #{tpu_custom_call.1} parent=1 // loop_exit
      _
    %403 = vsyncpa [#allocation6], 1
    %s404 = scalar_lea.sflag [#allocation6], 1
    %405 = vsyncpa %s404, 1

</llo_original>
